<compile_context>
chip_gen: v7x
topology: tpu7x:2x2x1
jax: 0.10.0
libtpu: 0.0.40
codegen_flags: <defaults>
</compile_context>

<pallas_src>
import functools

import numpy as np
import jax
import jax.numpy as jnp
from jax.experimental import pallas as pl
from jax.experimental.pallas import tpu as pltpu


# ------------------------------------------------------------------ layout ---

def _align(n, m):
    return (n + m - 1) // m * m


def _layout(input_size, hid_size, output_size, num_hid_layers):
    """Row/lane layout of the packed parameter buffer (row offsets 8-aligned).

    Lane layout of each fused block: [ Wout_segment (out_pad lanes) | W (hid lanes) ].
    """
    out_pad = _align(max(output_size, 1), 128)           # lane-dense output width
    in_dims = [input_size] + [hid_size] * (num_hid_layers - 1)
    lanes = out_pad + hid_size

    fused_offs, bias_offs = [], []
    off = 0
    for d in in_dims:                                    # [Wout_seg_i | W_i], then b_i
        fused_offs.append(off)
        off += _align(d, 8)
        bias_offs.append(off)
        off += 8
    wlast_off = off                                      # Wout segment of final state
    off += _align(hid_size, 8)
    bout_off = off
    off += 8
    total_rows = _align(off, 8)
    return (fused_offs, bias_offs, wlast_off, bout_off, total_rows, lanes,
            in_dims, out_pad)


def pack_params(params, input_size, hid_size, output_size, num_hid_layers,
                dtype=jnp.bfloat16):
    """Pack (W0,b0,...,W_{L-1},b_{L-1},Wout,bout) into one (rows, lanes) buffer.

    Weights are stored (in_features, out_features) — transposed vs. PyTorch —
    so the kernel computes y = x @ W + b.  Built in numpy, single transfer.
    """
    (fused_offs, bias_offs, wlast_off, bout_off, total_rows, lanes,
     in_dims, out_pad) = _layout(input_size, hid_size, output_size,
                                 num_hid_layers)

    buf = np.zeros((total_rows, lanes), np.float32)
    Wout = np.asarray(params[-2], np.float32)            # (in + L*hid, out)
    bout = np.asarray(params[-1], np.float32).reshape(1, output_size)

    row = 0
    for i in range(num_hid_layers):
        W = np.asarray(params[2 * i], np.float32)                    # (in_i, hid)
        b = np.asarray(params[2 * i + 1], np.float32).reshape(1, hid_size)
        d = in_dims[i]
        buf[fused_offs[i]:fused_offs[i] + d, 0:output_size] = Wout[row:row + d, :]
        buf[fused_offs[i]:fused_offs[i] + d, out_pad:out_pad + hid_size] = W
        buf[bias_offs[i]:bias_offs[i] + 1, 0:hid_size] = b
        row += d
    buf[wlast_off:wlast_off + hid_size, 0:output_size] = Wout[row:row + hid_size, :]
    buf[bout_off:bout_off + 1, 0:output_size] = bout
    return jnp.asarray(buf, dtype=dtype)


# ------------------------------------------------------------------ kernel ---

def _make_kernel(layout, num_hid_layers, hid_size, compute_dtype):
    (fused_offs, bias_offs, wlast_off, bout_off, _, _, in_dims, out_pad) = layout

    def kernel(x_ref, p_ref, out_ref):
        h = x_ref[...]                                               # (TB, in)
        # output accumulator starts at the (lane-padded) output bias
        acc = p_ref[bout_off:bout_off + 1, 0:out_pad].astype(jnp.float32)

        for i in range(num_hid_layers):
            fused = p_ref[fused_offs[i]:fused_offs[i] + in_dims[i],
                          0:out_pad + hid_size]                      # [Wout_seg|W]
            y = jnp.dot(h, fused, preferred_element_type=jnp.float32)
            acc = acc + y[:, 0:out_pad]                              # out contribution
            b = p_ref[bias_offs[i]:bias_offs[i] + 1, 0:hid_size]
            h = jnp.maximum(y[:, out_pad:out_pad + hid_size] + b,
                            0.0).astype(compute_dtype)               # next state

        # final hidden state only feeds the output layer
        w_last = p_ref[wlast_off:wlast_off + hid_size, 0:out_pad]
        acc = acc + jnp.dot(h, w_last, preferred_element_type=jnp.float32)
        out_ref[...] = acc.astype(out_ref.dtype)

    return kernel


# ----------------------------------------------------------------- wrapper ---

_TB_CAP = 4096     # (TB,128) f32 out block + (TB,in) act block stay tiny vs VMEM


def _device_info():
    try:
        kind = jax.devices()[0].device_kind.lower()
    except Exception:
        kind = ""
    is_v7x = ("v7" in kind) or ("7x" in kind)
    num_tc = 2 if is_v7x else 1
    return num_tc, is_v7x


def _pick_batch_tile(B, num_tc):
    """Single big step on 1-TC parts; even number of equal steps on 2-TC parts."""
    if B <= 8:
        return B
    if num_tc >= 2 and B % 16 == 0 and B // 2 <= _TB_CAP:
        return B // 2                      # exactly 2 equal steps -> both TCs busy
    if B <= _TB_CAP:
        return B                           # one grid step, no per-step overhead
    return _TB_CAP                         # huge batch: big multiple-of-8 tiles


@functools.partial(
    jax.jit,
    static_argnames=("input_size", "hid_size", "output_size", "num_hid_layers",
                     "tb", "vmem_limit_bytes", "single_buffer_params"))
def _forward_impl(x, packed, *, input_size, hid_size, output_size,
                  num_hid_layers, tb, vmem_limit_bytes, single_buffer_params):
    B = x.shape[0]
    layout = _layout(input_size, hid_size, output_size, num_hid_layers)
    out_pad = layout[-1]
    compute_dtype = packed.dtype
    x = x.astype(compute_dtype)

    kernel = _make_kernel(layout, num_hid_layers, hid_size, compute_dtype)

    # Constant-index param block (fetched once); single-buffer when supported.
    param_spec_kwargs = ({"pipeline_mode": pl.Buffered(1)}
                         if single_buffer_params else {})
    grid = (pl.cdiv(B, tb),)

    out = pl.pallas_call(
        kernel,
        out_shape=jax.ShapeDtypeStruct((B, out_pad), jnp.float32),
        grid_spec=pltpu.PrefetchScalarGridSpec(
            num_scalar_prefetch=0,
            grid=grid,
            in_specs=[
                pl.BlockSpec((tb, input_size), lambda i: (i, 0)),
                pl.BlockSpec(packed.shape, lambda i: (0, 0),
                             **param_spec_kwargs),
            ],
            out_specs=pl.BlockSpec((tb, out_pad), lambda i: (i, 0)),
        ),
        compiler_params=pltpu.CompilerParams(
            dimension_semantics=("parallel",),
            vmem_limit_bytes=vmem_limit_bytes,
        ),
    )(x, packed)
    return out[:, :output_size]


def mymodel_forward(x, packed, *, input_size, hid_size, output_size,
                    num_hid_layers):
    """x: (B, input_size) f32.  packed: packed parameter buffer (pack_params)."""
    num_tc, is_v7x = _device_info()
    tb = _pick_batch_tile(x.shape[0], num_tc)
    # v7x: 64 MiB VMEM per TC -> stay <= 48 MiB; v5e/v6e: 128 MiB -> 96 MiB OK.
    vmem_limit_bytes = (48 if is_v7x else 96) * 1024 * 1024
    last_err = None
    for single_buf in (True, False):       # fall back to default double-buffering
        try:
            return _forward_impl(
                x, packed, input_size=input_size, hid_size=hid_size,
                output_size=output_size, num_hid_layers=num_hid_layers,
                tb=tb, vmem_limit_bytes=vmem_limit_bytes,
                single_buffer_params=single_buf)
        except Exception as e:
            last_err = e
    raise last_err


# -------------------------------------------------------- init & reference ---

def init_params(key, input_size, hid_size, output_size, num_hid_layers):
    """Xavier-normal weights, small random biases (weights stored (in, out))."""
    # TODO(synk): the PyTorch 'optimal'/'box' init schemes are shape-specific
    # (they assume hid_size==3 / input_size==1) and are not reproduced here;
    # forward-pass semantics are unchanged.
    params = []
    dims_in = [input_size] + [hid_size] * (num_hid_layers - 1)
    for d_in in dims_in:
        key, k1, k2 = jax.random.split(key, 3)
        std = (2.0 / (d_in + hid_size)) ** 0.5
        W = std * jax.random.normal(k1, (d_in, hid_size), jnp.float32)
        b = 0.1 * jax.random.normal(k2, (1, hid_size), jnp.float32)
        params += [W, b]
    cat_dim = input_size + num_hid_layers * hid_size
    key, k1, k2 = jax.random.split(key, 3)
    std = (2.0 / (cat_dim + output_size)) ** 0.5
    Wout = std * jax.random.normal(k1, (cat_dim, output_size), jnp.float32)
    bout = 0.1 * jax.random.normal(k2, (1, output_size), jnp.float32)
    params += [Wout, bout]
    return tuple(params)


def reference_forward(x, params, num_hid_layers):
    """Pure-JAX f32 reference matching MyModel.forward."""
    states = [x]
    h = x
    for i in range(num_hid_layers):
        W, b = params[2 * i], params[2 * i + 1]
        h = jnp.maximum(h @ W + b, 0.0)
        states.append(h)
    Wout, bout = params[-2], params[-1]
    return jnp.concatenate(states, axis=-1) @ Wout + bout


def reference_forward_lowprec(x, params, num_hid_layers, dtype):
    """Same math at the kernel's precision: `dtype` operands, f32 accumulation."""
    h = x.astype(dtype)
    states = [h]
    for i in range(num_hid_layers):
        W = params[2 * i].astype(dtype)
        b = params[2 * i + 1].astype(dtype)
        h = jnp.maximum(
            jnp.dot(h, W, preferred_element_type=jnp.float32) + b, 0.0
        ).astype(dtype)
        states.append(h)
    Wout = params[-2].astype(dtype)
    bout = params[-1].astype(dtype)
    return (jnp.dot(jnp.concatenate(states, axis=-1), Wout,
                    preferred_element_type=jnp.float32) + bout)


# -------------------------------------------------------------------- main ---

if __name__ == "__main__":
    input_size = 8
    hid_size = 32
    output_size = 4
    num_hid_layers = 3
    batch = 16

    key = jax.random.PRNGKey(0)
    kx, kp = jax.random.split(key)
    x = jax.random.normal(kx, (batch, input_size), jnp.float32)
    params = init_params(kp, input_size, hid_size, output_size, num_hid_layers)
    packed = pack_params(params, input_size, hid_size, output_size,
                         num_hid_layers, dtype=jnp.bfloat16)

    out = mymodel_forward(
        x, packed,
        input_size=input_size, hid_size=hid_size,
        output_size=output_size, num_hid_layers=num_hid_layers)
    out = jax.block_until_ready(out)

    assert out.shape == (batch, output_size)
    ref_lp = reference_forward_lowprec(x, params, num_hid_layers, jnp.bfloat16)
    ref_f32 = reference_forward(x, params, num_hid_layers)
    assert jnp.allclose(out, ref_lp, atol=5e-3, rtol=5e-3), \
        float(jnp.max(jnp.abs(out - ref_lp)))
    assert jnp.allclose(out, ref_f32, atol=5e-2, rtol=5e-2), \
        float(jnp.max(jnp.abs(out - ref_f32)))

    print("KERNEL_OK")
</pallas_src>

<mosaic_0001>
module attributes {stable_mosaic.version = 11 : i64} {
  func.func @kernel(%arg0: i32, %arg1: memref<16x8xbf16, #tpu.memory_space<vmem>>, %arg2: memref<136x160xbf16, #tpu.memory_space<vmem>>, %arg3: memref<16x128xf32, #tpu.memory_space<vmem>>) attributes {dimension_semantics = [#tpu.dimension_semantics<parallel>], iteration_bounds = array<i64: 1>, scalar_prefetch = 0 : i64, scratch_operands = 0 : i64, tpu.core_type = #tpu.core_type<tc>, window_params = [{transform_indices = @transform_0, window_bounds = array<i64: 16, 8>}, {pipeline_mode = #tpu.pipeline_mode<synchronous>, transform_indices = @transform_1, window_bounds = array<i64: 136, 160>}, {transform_indices = @transform_2, window_bounds = array<i64: 16, 128>}]} {
    %c0 = arith.constant 0 : index
    %c0_0 = arith.constant 0 : index
    %0 = vector.load %arg1[%c0, %c0_0] : memref<16x8xbf16, #tpu.memory_space<vmem>>, vector<16x8xbf16>
    %c128 = arith.constant 128 : index
    %c0_1 = arith.constant 0 : index
    %1 = vector.load %arg2[%c128, %c0_1] : memref<136x160xbf16, #tpu.memory_space<vmem>>, vector<1x128xbf16>
    %2 = arith.extf %1 : vector<1x128xbf16> to vector<1x128xf32>
    %c0_2 = arith.constant 0 : index
    %c0_3 = arith.constant 0 : index
    %3 = vector.load %arg2[%c0_2, %c0_3] : memref<136x160xbf16, #tpu.memory_space<vmem>>, vector<8x160xbf16>
    %cst = arith.constant dense<0.000000e+00> : vector<16x160xf32>
    %4 = tpu.matmul %0, %3, %cst {dimension_numbers = #tpu.dot_dimension_numbers<[1], [0], [0], [1], [0, 0, 1, 1], [], []>} : vector<16x8xbf16>, vector<8x160xbf16>, vector<16x160xf32> -> vector<16x160xf32>
    %5 = vector.extract_strided_slice %4 {offsets = [0, 0], sizes = [16, 128], strides = [1, 1]} : vector<16x160xf32> to vector<16x128xf32>
    %6 = vector.broadcast %2 : vector<1x128xf32> to vector<16x128xf32>
    %7 = arith.addf %6, %5 : vector<16x128xf32>
    %c8 = arith.constant 8 : index
    %c0_4 = arith.constant 0 : index
    %8 = vector.load %arg2[%c8, %c0_4] : memref<136x160xbf16, #tpu.memory_space<vmem>>, vector<1x32xbf16>
    %9 = vector.extract_strided_slice %4 {offsets = [0, 128], sizes = [16, 32], strides = [1, 1]} : vector<16x160xf32> to vector<16x32xf32>
    %10 = arith.extf %8 : vector<1x32xbf16> to vector<1x32xf32>
    %11 = vector.broadcast %10 : vector<1x32xf32> to vector<16x32xf32>
    %12 = arith.addf %9, %11 : vector<16x32xf32>
    %cst_5 = arith.constant 0.000000e+00 : f32
    %13 = vector.broadcast %cst_5 : f32 to vector<16x32xf32>
    %14 = arith.maximumf %12, %13 : vector<16x32xf32>
    %15 = arith.truncf %14 : vector<16x32xf32> to vector<16x32xbf16>
    %c16 = arith.constant 16 : index
    %c0_6 = arith.constant 0 : index
    %16 = vector.load %arg2[%c16, %c0_6] : memref<136x160xbf16, #tpu.memory_space<vmem>>, vector<32x160xbf16>
    %cst_7 = arith.constant dense<0.000000e+00> : vector<16x160xf32>
    %17 = tpu.matmul %15, %16, %cst_7 {dimension_numbers = #tpu.dot_dimension_numbers<[1], [0], [0], [1], [0, 0, 1, 1], [], []>} : vector<16x32xbf16>, vector<32x160xbf16>, vector<16x160xf32> -> vector<16x160xf32>
    %18 = vector.extract_strided_slice %17 {offsets = [0, 0], sizes = [16, 128], strides = [1, 1]} : vector<16x160xf32> to vector<16x128xf32>
    %19 = arith.addf %7, %18 : vector<16x128xf32>
    %c48 = arith.constant 48 : index
    %c0_8 = arith.constant 0 : index
    %20 = vector.load %arg2[%c48, %c0_8] : memref<136x160xbf16, #tpu.memory_space<vmem>>, vector<1x32xbf16>
    %21 = vector.extract_strided_slice %17 {offsets = [0, 128], sizes = [16, 32], strides = [1, 1]} : vector<16x160xf32> to vector<16x32xf32>
    %22 = arith.extf %20 : vector<1x32xbf16> to vector<1x32xf32>
    %23 = vector.broadcast %22 : vector<1x32xf32> to vector<16x32xf32>
    %24 = arith.addf %21, %23 : vector<16x32xf32>
    %cst_9 = arith.constant 0.000000e+00 : f32
    %25 = vector.broadcast %cst_9 : f32 to vector<16x32xf32>
    %26 = arith.maximumf %24, %25 : vector<16x32xf32>
    %27 = arith.truncf %26 : vector<16x32xf32> to vector<16x32xbf16>
    %c56 = arith.constant 56 : index
    %c0_10 = arith.constant 0 : index
    %28 = vector.load %arg2[%c56, %c0_10] : memref<136x160xbf16, #tpu.memory_space<vmem>>, vector<32x160xbf16>
    %cst_11 = arith.constant dense<0.000000e+00> : vector<16x160xf32>
    %29 = tpu.matmul %27, %28, %cst_11 {dimension_numbers = #tpu.dot_dimension_numbers<[1], [0], [0], [1], [0, 0, 1, 1], [], []>} : vector<16x32xbf16>, vector<32x160xbf16>, vector<16x160xf32> -> vector<16x160xf32>
    %30 = vector.extract_strided_slice %29 {offsets = [0, 0], sizes = [16, 128], strides = [1, 1]} : vector<16x160xf32> to vector<16x128xf32>
    %31 = arith.addf %19, %30 : vector<16x128xf32>
    %c88 = arith.constant 88 : index
    %c0_12 = arith.constant 0 : index
    %32 = vector.load %arg2[%c88, %c0_12] : memref<136x160xbf16, #tpu.memory_space<vmem>>, vector<1x32xbf16>
    %33 = vector.extract_strided_slice %29 {offsets = [0, 128], sizes = [16, 32], strides = [1, 1]} : vector<16x160xf32> to vector<16x32xf32>
    %34 = arith.extf %32 : vector<1x32xbf16> to vector<1x32xf32>
    %35 = vector.broadcast %34 : vector<1x32xf32> to vector<16x32xf32>
    %36 = arith.addf %33, %35 : vector<16x32xf32>
    %cst_13 = arith.constant 0.000000e+00 : f32
    %37 = vector.broadcast %cst_13 : f32 to vector<16x32xf32>
    %38 = arith.maximumf %36, %37 : vector<16x32xf32>
    %39 = arith.truncf %38 : vector<16x32xf32> to vector<16x32xbf16>
    %c96 = arith.constant 96 : index
    %c0_14 = arith.constant 0 : index
    %40 = vector.load %arg2[%c96, %c0_14] : memref<136x160xbf16, #tpu.memory_space<vmem>>, vector<32x128xbf16>
    %cst_15 = arith.constant dense<0.000000e+00> : vector<16x128xf32>
    %41 = tpu.matmul %39, %40, %cst_15 {dimension_numbers = #tpu.dot_dimension_numbers<[1], [0], [0], [1], [0, 0, 1, 1], [], []>} : vector<16x32xbf16>, vector<32x128xbf16>, vector<16x128xf32> -> vector<16x128xf32>
    %42 = arith.addf %31, %41 : vector<16x128xf32>
    %c0_16 = arith.constant 0 : index
    %c0_17 = arith.constant 0 : index
    %43 = vector.load %arg3[%c0_16, %c0_17] : memref<16x128xf32, #tpu.memory_space<vmem>>, vector<16x128xf32>
    tpu.vector_store %arg3[%c0_16, %c0_17], %42 {strides = array<i32>} : memref<16x128xf32, #tpu.memory_space<vmem>>, vector<16x128xf32>,
    return
  }
  func.func @transform_0(%arg0: i32) -> (i32, i32) {
    %c0_i32 = arith.constant 0 : i32
    %c0_i32_0 = arith.constant 0 : i32
    return %arg0, %c0_i32 : i32, i32
  }
  func.func @transform_1(%arg0: i32) -> (i32, i32) {
    %c0_i32 = arith.constant 0 : i32
    %c0_i32_0 = arith.constant 0 : i32
    %c0_i32_1 = arith.constant 0 : i32
    return %c0_i32, %c0_i32_0 : i32, i32
  }
  func.func @transform_2(%arg0: i32) -> (i32, i32) {
    %c0_i32 = arith.constant 0 : i32
    %c0_i32_0 = arith.constant 0 : i32
    return %arg0, %c0_i32 : i32, i32
  }
}

module attributes {stable_mosaic.version = 11 : i64} {
  func.func @kernel(%arg0: i32, %arg1: memref<16x8xbf16, #tpu.memory_space<vmem>>, %arg2: memref<136x160xbf16, #tpu.memory_space<vmem>>, %arg3: memref<16x128xf32, #tpu.memory_space<vmem>>) attributes {dimension_semantics = [#tpu.dimension_semantics<parallel>], iteration_bounds = array<i64: 1>, scalar_prefetch = 0 : i64, scratch_operands = 0 : i64, tpu.core_type = #tpu.core_type<tc>, window_params = [{transform_indices = @transform_0, window_bounds = array<i64: 16, 8>}, {pipeline_mode = #tpu.pipeline_mode<synchronous>, transform_indices = @transform_1, window_bounds = array<i64: 136, 160>}, {transform_indices = @transform_2, window_bounds = array<i64: 16, 128>}]} {
    %c0 = arith.constant 0 : index
    %c0_0 = arith.constant 0 : index
    %0 = vector.load %arg1[%c0, %c0_0] : memref<16x8xbf16, #tpu.memory_space<vmem>>, vector<16x8xbf16>
    %c128 = arith.constant 128 : index
    %c0_1 = arith.constant 0 : index
    %1 = vector.load %arg2[%c128, %c0_1] : memref<136x160xbf16, #tpu.memory_space<vmem>>, vector<1x128xbf16>
    %2 = arith.extf %1 : vector<1x128xbf16> to vector<1x128xf32>
    %c0_2 = arith.constant 0 : index
    %c0_3 = arith.constant 0 : index
    %3 = vector.load %arg2[%c0_2, %c0_3] : memref<136x160xbf16, #tpu.memory_space<vmem>>, vector<8x160xbf16>
    %cst = arith.constant dense<0.000000e+00> : vector<16x160xf32>
    %4 = tpu.matmul %0, %3, %cst {dimension_numbers = #tpu.dot_dimension_numbers<[1], [0], [0], [1], [0, 0, 1, 1], [], []>} : vector<16x8xbf16>, vector<8x160xbf16>, vector<16x160xf32> -> vector<16x160xf32>
    %5 = vector.extract_strided_slice %4 {offsets = [0, 0], sizes = [16, 128], strides = [1, 1]} : vector<16x160xf32> to vector<16x128xf32>
    %6 = vector.broadcast %2 : vector<1x128xf32> to vector<16x128xf32>
    %7 = arith.addf %6, %5 : vector<16x128xf32>
    %c8 = arith.constant 8 : index
    %c0_4 = arith.constant 0 : index
    %8 = vector.load %arg2[%c8, %c0_4] : memref<136x160xbf16, #tpu.memory_space<vmem>>, vector<1x32xbf16>
    %9 = vector.extract_strided_slice %4 {offsets = [0, 128], sizes = [16, 32], strides = [1, 1]} : vector<16x160xf32> to vector<16x32xf32>
    %10 = arith.extf %8 : vector<1x32xbf16> to vector<1x32xf32>
    %11 = vector.broadcast %10 : vector<1x32xf32> to vector<16x32xf32>
    %12 = arith.addf %9, %11 : vector<16x32xf32>
    %cst_5 = arith.constant 0.000000e+00 : f32
    %13 = vector.broadcast %cst_5 : f32 to vector<16x32xf32>
    %14 = arith.maximumf %12, %13 : vector<16x32xf32>
    %15 = arith.truncf %14 : vector<16x32xf32> to vector<16x32xbf16>
    %c16 = arith.constant 16 : index
    %c0_6 = arith.constant 0 : index
    %16 = vector.load %arg2[%c16, %c0_6] : memref<136x160xbf16, #tpu.memory_space<vmem>>, vector<32x160xbf16>
    %cst_7 = arith.constant dense<0.000000e+00> : vector<16x160xf32>
    %17 = tpu.matmul %15, %16, %cst_7 {dimension_numbers = #tpu.dot_dimension_numbers<[1], [0], [0], [1], [0, 0, 1, 1], [], []>} : vector<16x32xbf16>, vector<32x160xbf16>, vector<16x160xf32> -> vector<16x160xf32>
    %18 = vector.extract_strided_slice %17 {offsets = [0, 0], sizes = [16, 128], strides = [1, 1]} : vector<16x160xf32> to vector<16x128xf32>
    %19 = arith.addf %7, %18 : vector<16x128xf32>
    %c48 = arith.constant 48 : index
    %c0_8 = arith.constant 0 : index
    %20 = vector.load %arg2[%c48, %c0_8] : memref<136x160xbf16, #tpu.memory_space<vmem>>, vector<1x32xbf16>
    %21 = vector.extract_strided_slice %17 {offsets = [0, 128], sizes = [16, 32], strides = [1, 1]} : vector<16x160xf32> to vector<16x32xf32>
    %22 = arith.extf %20 : vector<1x32xbf16> to vector<1x32xf32>
    %23 = vector.broadcast %22 : vector<1x32xf32> to vector<16x32xf32>
    %24 = arith.addf %21, %23 : vector<16x32xf32>
    %cst_9 = arith.constant 0.000000e+00 : f32
    %25 = vector.broadcast %cst_9 : f32 to vector<16x32xf32>
    %26 = arith.maximumf %24, %25 : vector<16x32xf32>
    %27 = arith.truncf %26 : vector<16x32xf32> to vector<16x32xbf16>
    %c56 = arith.constant 56 : index
    %c0_10 = arith.constant 0 : index
    %28 = vector.load %arg2[%c56, %c0_10] : memref<136x160xbf16, #tpu.memory_space<vmem>>, vector<32x160xbf16>
    %cst_11 = arith.constant dense<0.000000e+00> : vector<16x160xf32>
    %29 = tpu.matmul %27, %28, %cst_11 {dimension_numbers = #tpu.dot_dimension_numbers<[1], [0], [0], [1], [0, 0, 1, 1], [], []>} : vector<16x32xbf16>, vector<32x160xbf16>, vector<16x160xf32> -> vector<16x160xf32>
    %30 = vector.extract_strided_slice %29 {offsets = [0, 0], sizes = [16, 128], strides = [1, 1]} : vector<16x160xf32> to vector<16x128xf32>
    %31 = arith.addf %19, %30 : vector<16x128xf32>
    %c88 = arith.constant 88 : index
    %c0_12 = arith.constant 0 : index
    %32 = vector.load %arg2[%c88, %c0_12] : memref<136x160xbf16, #tpu.memory_space<vmem>>, vector<1x32xbf16>
    %33 = vector.extract_strided_slice %29 {offsets = [0, 128], sizes = [16, 32], strides = [1, 1]} : vector<16x160xf32> to vector<16x32xf32>
    %34 = arith.extf %32 : vector<1x32xbf16> to vector<1x32xf32>
    %35 = vector.broadcast %34 : vector<1x32xf32> to vector<16x32xf32>
    %36 = arith.addf %33, %35 : vector<16x32xf32>
    %cst_13 = arith.constant 0.000000e+00 : f32
    %37 = vector.broadcast %cst_13 : f32 to vector<16x32xf32>
    %38 = arith.maximumf %36, %37 : vector<16x32xf32>
    %39 = arith.truncf %38 : vector<16x32xf32> to vector<16x32xbf16>
    %c96 = arith.constant 96 : index
    %c0_14 = arith.constant 0 : index
    %40 = vector.load %arg2[%c96, %c0_14] : memref<136x160xbf16, #tpu.memory_space<vmem>>, vector<32x128xbf16>
    %cst_15 = arith.constant dense<0.000000e+00> : vector<16x128xf32>
    %41 = tpu.matmul %39, %40, %cst_15 {dimension_numbers = #tpu.dot_dimension_numbers<[1], [0], [0], [1], [0, 0, 1, 1], [], []>} : vector<16x32xbf16>, vector<32x128xbf16>, vector<16x128xf32> -> vector<16x128xf32>
    %42 = arith.addf %31, %41 : vector<16x128xf32>
    %c0_16 = arith.constant 0 : index
    %c0_17 = arith.constant 0 : index
    %43 = vector.load %arg3[%c0_16, %c0_17] : memref<16x128xf32, #tpu.memory_space<vmem>>, vector<16x128xf32>
    tpu.vector_store %arg3[%c0_16, %c0_17], %42 {strides = array<i32>} : memref<16x128xf32, #tpu.memory_space<vmem>>, vector<16x128xf32>,
    return
  }
  func.func @transform_0(%arg0: i32) -> (i32, i32) {
    %c0_i32 = arith.constant 0 : i32
    %c0_i32_0 = arith.constant 0 : i32
    return %arg0, %c0_i32 : i32, i32
  }
  func.func @transform_1(%arg0: i32) -> (i32, i32) {
    %c0_i32 = arith.constant 0 : i32
    %c0_i32_0 = arith.constant 0 : i32
    %c0_i32_1 = arith.constant 0 : i32
    return %c0_i32, %c0_i32_0 : i32, i32
  }
  func.func @transform_2(%arg0: i32) -> (i32, i32) {
    %c0_i32 = arith.constant 0 : i32
    %c0_i32_0 = arith.constant 0 : i32
    return %arg0, %c0_i32 : i32, i32
  }
}

</mosaic_0001>

<llo_original>
// kernel: _forward_impl.1
$region0: #{_forward_impl.1}
  #allocation0 [shape = 'u32[]', space=smem, size = 0x4, offset = 0x4, fixed_abs, tag = 'smem constant byte address 0x4 - core index']
  #allocation1 [shape = 'u32[144,128]{1,0:T(1,128)}', space=vmem, size = 0x12000, scoped, tag = 'internal scratch']
  %s0 = inlined_call_operand.hbm [shape: bf16[16,8], index: 0, kind: input, shape index: {}]
  %s1 = inlined_call_operand.hbm [shape: bf16[136,160], index: 1, kind: input, shape index: {}]
  %s2 = inlined_call_operand.hbm [shape: f32[16,128], index: 2, kind: output, shape index: {}]
  %s3 = sld [smem:[#allocation0]]
  $region26: #{_forward_impl.1} parent=0
    _
  %s5 = ssub.s32 1, %s3
  %s6 = scalar_select 0, %s5, %s3
  $region1: #{_forward_impl.1} parent=0
    #allocation2 [shape = 'u8[4096]{0}', space=vmem, size = 0x1000, scoped, tag = 'input window, operand 0, single buffered']
    #allocation3 [shape = 's32[1]{0}', space=sflag, size = 0x4, scoped, tag = 'scoped memory for _forward_impl.1']
    #allocation4 [shape = 's32[1]{0}', space=sflag, size = 0x4, scoped, tag = 'scoped memory for _forward_impl.1']
    #allocation5 [shape = 'u8[69632]{0}', space=vmem, size = 0x11000, scoped, tag = 'input window, operand 1, single buffered']
    #allocation6 [shape = 's32[1]{0}', space=sflag, size = 0x4, scoped, tag = 'scoped memory for _forward_impl.1']
    #allocation7 [shape = 'u8[8192]{0}', space=vmem, size = 0x2000, scoped, tag = 'output window, operand 0, single buffered']
    %7 = vsyncpa [#allocation3], 0
    %8 = vsyncpa [#allocation6], 0
    %9 = vsyncpa [#allocation4], 0
    // Predicated region
    $region2: #{_forward_impl.1} parent=1 // pred_check
      _
    $region3: #{_forward_impl.1} parent=1 // pred_check_branch
      %11 = sbr.rel (0) target = $region5
    $region4: #{_forward_impl.1} parent=1 // pred_region
      %s13 = ssub.s32 128, 128
      %14 = vsyncadd [#allocation3], %s13
      %s15 = sshll.u32 [#allocation2], 4
      %s16 = int_to_ptr.vmem [resolvable:$true] %s15
      %21 = dma.hbm_to_vmem [thread:$0]  %s0, 128, %s16, [#allocation3], 64, 64, 4
    $region5: #{_forward_impl.1} parent=1 // pred_fallthru
      _
    // Predicated region
    $region6: #{_forward_impl.1} parent=1 // pred_check
      _
    $region7: #{_forward_impl.1} parent=1 // pred_check_branch
      %23 = sbr.rel (0) target = $region9
    $region8: #{_forward_impl.1} parent=1 // pred_region
      %s25 = ssub.s32 2176, 2176
      %26 = vsyncadd [#allocation6], %s25
      %s27 = sshll.u32 [#allocation5], 4
      %s28 = int_to_ptr.vmem [resolvable:$true] %s27
      %33 = dma.hbm_to_vmem [thread:$0]  %s1, 2176, %s28, [#allocation6], 128, 128, 8
    $region9: #{_forward_impl.1} parent=1 // pred_fallthru
      _
    // Predicated region
    $region10: #{_forward_impl.1} parent=1 // pred_check
      _
    $region11: #{_forward_impl.1} parent=1 // pred_check_branch
      %35 = sbr.rel (0) target = $region13
    $region12: #{_forward_impl.1} parent=1 // pred_region
      %36 = dma.done [#allocation3], 128
    $region13: #{_forward_impl.1} parent=1 // pred_fallthru
      _
    // Predicated region
    $region14: #{_forward_impl.1} parent=1 // pred_check
      _
    $region15: #{_forward_impl.1} parent=1 // pred_check_branch
      %38 = sbr.rel (0) target = $region17
    $region16: #{_forward_impl.1} parent=1 // pred_region
      %39 = dma.done [#allocation6], 2176
    $region17: #{_forward_impl.1} parent=1 // pred_fallthru
      _
    %v41 = vld [vmem:[#allocation2] sm:$0xf]
    %v42 = vld [vmem:[#allocation2 + $0x4] sm:$0xf]
    %v43 = vld [vmem:[#allocation5 + $0x80] sm:$0x1]
    %v44 = vunpack.c.l.bf16 %v43
    %v45 = vld [vmem:[#allocation5] sm:$0xff]
    %v48 = vunpack.c.l.b16 %v41
    %v49 = vunpack.c.l.b16 %v42
    %v50 = vpack.c.b16 %v49, %v48
    %v52 = vunpack.c.l.b16 %v45
    %v53 = vunpack.c.h.b16 %v45
    %v54 = vpack.c.b16 %v52, %v52
    %v55 = vpack.c.b16 %v53, %v53
    %vm56 = vcmask 64512
    %v58 = vsel %vm56, %v50, 0
    %vm60 = vcmask 1043456
    %v62 = vsel %vm60, %v54, 0
    %v65 = vsel %vm60, %v55, 0
    %67 = vmatprep.subr.bf16.mxu0 %v65
    %68 = vmatpush1.bf16.msra.mxu0 %v62
    %69 = vmatprep.subr.bf16.mxu0 0
    %70 = vmatpush1.bf16.msra.mxu0 0
    %71 = vmatprep.subr.bf16.mxu0 0
    %72 = vmatpush1.bf16.msra.mxu0 0
    %73 = vmatprep.subr.bf16.mxu0 0
    %74 = vmatpush1.bf16.msra.mxu0 0
    %75 = vmatprep.subr.bf16.mxu0 0
    %76 = vmatpush1.bf16.msra.mxu0 0
    %77 = vmatprep.subr.bf16.mxu0 0
    %78 = vmatpush1.bf16.msra.mxu0 0
    %79 = vmatprep.subr.bf16.mxu0 0
    %80 = vmatpush1.bf16.msra.mxu0 0
    %81 = vmatprep.subr.bf16.mxu0 0
    %82 = vmatpush1.bf16.msra.mxu0 0
    %83 = vmatprep.subr.bf16.mxu0 0
    %84 = vmatpush1.bf16.msra.mxu0 0
    %85 = vmatprep.subr.bf16.mxu0 0
    %86 = vmatpush1.bf16.msra.mxu0 0
    %87 = vmatprep.subr.bf16.mxu0 0
    %88 = vmatpush1.bf16.msra.mxu0 0
    %89 = vmatprep.subr.bf16.mxu0 0
    %90 = vmatpush1.bf16.msra.mxu0 0
    %91 = vmatprep.subr.bf16.mxu0 0
    %92 = vmatpush1.bf16.msra.mxu0 0
    %93 = vmatprep.subr.bf16.mxu0 0
    %94 = vmatpush1.bf16.msra.mxu0 0
    %95 = vmatprep.subr.bf16.mxu0 0
    %96 = vmatpush1.bf16.msra.mxu0 0
    %97 = vmatprep.subr.bf16.mxu0 0
    %98 = vmatpush1.bf16.msra.mxu0 0
    %99 = vmatprep.mubr.bf16.mxu0 0
    %100 = vmatmul.mubr.bf16.gmra.mrb[0].mxu0 %v58
    %v101 = vpop.f32.mrb[0].mxu0
    %v102 = vadd.f32 0.0, %v101
    %v103 = vpop.f32.mrb[0].mxu0
    %v104 = vadd.f32 0.0, %v103
    %v105 = vpop.f32.mrb[0].mxu0
    %v106 = vadd.f32 0.0, %v105
    %v107 = vpop.f32.mrb[0].mxu0
    %v108 = vadd.f32 0.0, %v107
    %109 = vdwg.mxu0
    %v110 = vlaneseq
    %v111 = vshrl.u32 %v110, 7
    %v112 = vsub.s32 0, %v111
    %v113 = vrot.slane %v44, %v112
    %v114 = vadd.f32 %v113, %v102
    %v115 = vadd.f32 %v113, %v106
    %v116 = vld [vmem:[#allocation5 + $0x8] sm:$0x1]
    %v117 = vunpack.c.l.bf16 %v116
    %v118 = vlaneseq
    %v119 = vshrl.u32 %v118, 7
    %v120 = vsub.s32 0, %v119
    %v121 = vrot.slane %v117, %v120
    %v122 = vadd.f32 %v104, %v121
    %v123 = vadd.f32 %v108, %v121
    %v124 = vmax.f32 %v122, 0.0
    %v125 = vmax.f32 %v123, 0.0
    %v126 = vpack.c.bf16 %v125, %v124
    %v127 = vld [vmem:[#allocation5 + $0x10] sm:$0xff]
    %v128 = vld [vmem:[#allocation5 + $0x18] sm:$0xff]
    %v129 = vld [vmem:[#allocation5 + $0x20] sm:$0xff]
    %v130 = vld [vmem:[#allocation5 + $0x28] sm:$0xff]
    %v135 = vunpack.c.l.b16 %v127
    %v136 = vunpack.c.h.b16 %v127
    %v137 = vunpack.c.l.b16 %v128
    %v138 = vunpack.c.h.b16 %v128
    %v139 = vunpack.c.l.b16 %v129
    %v140 = vunpack.c.h.b16 %v129
    %v141 = vunpack.c.l.b16 %v130
    %v142 = vunpack.c.h.b16 %v130
    %v143 = vpack.c.b16 %v137, %v135
    %v144 = vpack.c.b16 %v138, %v136
    %v145 = vpack.c.b16 %v141, %v139
    %v146 = vpack.c.b16 %v142, %v140
    %vm151 = vcmask 261120
    %v153 = vsel %vm151, %v126, 0
    %155 = vmatprep.subr.bf16.mxu0 %v144
    %156 = vmatpush1.bf16.msra.mxu0 %v143
    %157 = vmatprep.subr.bf16.mxu0 %v146
    %158 = vmatpush1.bf16.msra.mxu0 %v145
    %159 = vmatprep.subr.bf16.mxu0 0
    %160 = vmatpush1.bf16.msra.mxu0 0
    %161 = vmatprep.subr.bf16.mxu0 0
    %162 = vmatpush1.bf16.msra.mxu0 0
    %163 = vmatprep.subr.bf16.mxu0 0
    %164 = vmatpush1.bf16.msra.mxu0 0
    %165 = vmatprep.subr.bf16.mxu0 0
    %166 = vmatpush1.bf16.msra.mxu0 0
    %167 = vmatprep.subr.bf16.mxu0 0
    %168 = vmatpush1.bf16.msra.mxu0 0
    %169 = vmatprep.subr.bf16.mxu0 0
    %170 = vmatpush1.bf16.msra.mxu0 0
    %171 = vmatprep.subr.bf16.mxu0 0
    %172 = vmatpush1.bf16.msra.mxu0 0
    %173 = vmatprep.subr.bf16.mxu0 0
    %174 = vmatpush1.bf16.msra.mxu0 0
    %175 = vmatprep.subr.bf16.mxu0 0
    %176 = vmatpush1.bf16.msra.mxu0 0
    %177 = vmatprep.subr.bf16.mxu0 0
    %178 = vmatpush1.bf16.msra.mxu0 0
    %179 = vmatprep.subr.bf16.mxu0 0
    %180 = vmatpush1.bf16.msra.mxu0 0
    %181 = vmatprep.subr.bf16.mxu0 0
    %182 = vmatpush1.bf16.msra.mxu0 0
    %183 = vmatprep.subr.bf16.mxu0 0
    %184 = vmatpush1.bf16.msra.mxu0 0
    %185 = vmatprep.subr.bf16.mxu0 0
    %186 = vmatpush1.bf16.msra.mxu0 0
    %187 = vmatprep.mubr.bf16.mxu0 0
    %188 = vmatmul.mubr.bf16.gmra.mrb[0].mxu0 %v153
    %v189 = vpop.f32.mrb[0].mxu0
    %v190 = vadd.f32 0.0, %v189
    %v191 = vpop.f32.mrb[0].mxu0
    %v192 = vadd.f32 0.0, %v191
    %v193 = vpop.f32.mrb[0].mxu0
    %v194 = vadd.f32 0.0, %v193
    %v195 = vpop.f32.mrb[0].mxu0
    %v196 = vadd.f32 0.0, %v195
    %197 = vdwg.mxu0
    %v198 = vadd.f32 %v114, %v190
    %v199 = vadd.f32 %v115, %v194
    %v200 = vld [vmem:[#allocation5 + $0x30] sm:$0x1]
    %v201 = vunpack.c.l.bf16 %v200
    %v202 = vlaneseq
    %v203 = vshrl.u32 %v202, 7
    %v204 = vsub.s32 0, %v203
    %v205 = vrot.slane %v201, %v204
    %v206 = vadd.f32 %v192, %v205
    %v207 = vadd.f32 %v196, %v205
    %v208 = vmax.f32 %v206, 0.0
    %v209 = vmax.f32 %v207, 0.0
    %v210 = vpack.c.bf16 %v209, %v208
    %v211 = vld [vmem:[#allocation5 + $0x38] sm:$0xff]
    %v212 = vld [vmem:[#allocation5 + $0x40] sm:$0xff]
    %v213 = vld [vmem:[#allocation5 + $0x48] sm:$0xff]
    %v214 = vld [vmem:[#allocation5 + $0x50] sm:$0xff]
    %v219 = vunpack.c.l.b16 %v211
    %v220 = vunpack.c.h.b16 %v211
    %v221 = vunpack.c.l.b16 %v212
    %v222 = vunpack.c.h.b16 %v212
    %v223 = vunpack.c.l.b16 %v213
    %v224 = vunpack.c.h.b16 %v213
    %v225 = vunpack.c.l.b16 %v214
    %v226 = vunpack.c.h.b16 %v214
    %v227 = vpack.c.b16 %v221, %v219
    %v228 = vpack.c.b16 %v222, %v220
    %v229 = vpack.c.b16 %v225, %v223
    %v230 = vpack.c.b16 %v226, %v224
    %v236 = vsel %vm151, %v210, 0
    %238 = vmatprep.subr.bf16.mxu0 %v228
    %239 = vmatpush1.bf16.msra.mxu0 %v227
    %240 = vmatprep.subr.bf16.mxu0 %v230
    %241 = vmatpush1.bf16.msra.mxu0 %v229
    %242 = vmatprep.subr.bf16.mxu0 0
    %243 = vmatpush1.bf16.msra.mxu0 0
    %244 = vmatprep.subr.bf16.mxu0 0
    %245 = vmatpush1.bf16.msra.mxu0 0
    %246 = vmatprep.subr.bf16.mxu0 0
    %247 = vmatpush1.bf16.msra.mxu0 0
    %248 = vmatprep.subr.bf16.mxu0 0
    %249 = vmatpush1.bf16.msra.mxu0 0
    %250 = vmatprep.subr.bf16.mxu0 0
    %251 = vmatpush1.bf16.msra.mxu0 0
    %252 = vmatprep.subr.bf16.mxu0 0
    %253 = vmatpush1.bf16.msra.mxu0 0
    %254 = vmatprep.subr.bf16.mxu0 0
    %255 = vmatpush1.bf16.msra.mxu0 0
    %256 = vmatprep.subr.bf16.mxu0 0
    %257 = vmatpush1.bf16.msra.mxu0 0
    %258 = vmatprep.subr.bf16.mxu0 0
    %259 = vmatpush1.bf16.msra.mxu0 0
    %260 = vmatprep.subr.bf16.mxu0 0
    %261 = vmatpush1.bf16.msra.mxu0 0
    %262 = vmatprep.subr.bf16.mxu0 0
    %263 = vmatpush1.bf16.msra.mxu0 0
    %264 = vmatprep.subr.bf16.mxu0 0
    %265 = vmatpush1.bf16.msra.mxu0 0
    %266 = vmatprep.subr.bf16.mxu0 0
    %267 = vmatpush1.bf16.msra.mxu0 0
    %268 = vmatprep.subr.bf16.mxu0 0
    %269 = vmatpush1.bf16.msra.mxu0 0
    %270 = vmatprep.mubr.bf16.mxu0 0
    %271 = vmatmul.mubr.bf16.gmra.mrb[0].mxu0 %v236
    %v272 = vpop.f32.mrb[0].mxu0
    %v273 = vadd.f32 0.0, %v272
    %v274 = vpop.f32.mrb[0].mxu0
    %v275 = vadd.f32 0.0, %v274
    %v276 = vpop.f32.mrb[0].mxu0
    %v277 = vadd.f32 0.0, %v276
    %v278 = vpop.f32.mrb[0].mxu0
    %v279 = vadd.f32 0.0, %v278
    %280 = vdwg.mxu0
    %v281 = vadd.f32 %v198, %v273
    %v282 = vadd.f32 %v199, %v277
    %v283 = vld [vmem:[#allocation5 + $0x58] sm:$0x1]
    %v284 = vunpack.c.l.bf16 %v283
    %v285 = vlaneseq
    %v286 = vshrl.u32 %v285, 7
    %v287 = vsub.s32 0, %v286
    %v288 = vrot.slane %v284, %v287
    %v289 = vadd.f32 %v275, %v288
    %v290 = vadd.f32 %v279, %v288
    %v291 = vmax.f32 %v289, 0.0
    %v292 = vmax.f32 %v290, 0.0
    %v293 = vpack.c.bf16 %v292, %v291
    %v294 = vld [vmem:[#allocation5 + $0x60] sm:$0xf]
    %v295 = vld [vmem:[#allocation5 + $0x68] sm:$0xf]
    %v296 = vld [vmem:[#allocation5 + $0x70] sm:$0xf]
    %v297 = vld [vmem:[#allocation5 + $0x78] sm:$0xf]
    %v302 = vunpack.c.l.b16 %v294
    %v303 = vunpack.c.l.b16 %v295
    %v304 = vunpack.c.l.b16 %v296
    %v305 = vunpack.c.l.b16 %v297
    %v306 = vpack.c.b16 %v303, %v302
    %v307 = vpack.c.b16 %v305, %v304
    %v311 = vsel %vm151, %v293, 0
    %313 = vmatprep.subr.bf16.mxu0 0
    %314 = vmatpush1.bf16.msra.mxu0 %v306
    %315 = vmatprep.subr.bf16.mxu0 0
    %316 = vmatpush1.bf16.msra.mxu0 %v307
    %317 = vmatprep.subr.bf16.mxu0 0
    %318 = vmatpush1.bf16.msra.mxu0 0
    %319 = vmatprep.subr.bf16.mxu0 0
    %320 = vmatpush1.bf16.msra.mxu0 0
    %321 = vmatprep.subr.bf16.mxu0 0
    %322 = vmatpush1.bf16.msra.mxu0 0
    %323 = vmatprep.subr.bf16.mxu0 0
    %324 = vmatpush1.bf16.msra.mxu0 0
    %325 = vmatprep.subr.bf16.mxu0 0
    %326 = vmatpush1.bf16.msra.mxu0 0
    %327 = vmatprep.subr.bf16.mxu0 0
    %328 = vmatpush1.bf16.msra.mxu0 0
    %329 = vmatprep.subr.bf16.mxu0 0
    %330 = vmatpush1.bf16.msra.mxu0 0
    %331 = vmatprep.subr.bf16.mxu0 0
    %332 = vmatpush1.bf16.msra.mxu0 0
    %333 = vmatprep.subr.bf16.mxu0 0
    %334 = vmatpush1.bf16.msra.mxu0 0
    %335 = vmatprep.subr.bf16.mxu0 0
    %336 = vmatpush1.bf16.msra.mxu0 0
    %337 = vmatprep.subr.bf16.mxu0 0
    %338 = vmatpush1.bf16.msra.mxu0 0
    %339 = vmatprep.subr.bf16.mxu0 0
    %340 = vmatpush1.bf16.msra.mxu0 0
    %341 = vmatprep.subr.bf16.mxu0 0
    %342 = vmatpush1.bf16.msra.mxu0 0
    %343 = vmatprep.subr.bf16.mxu0 0
    %344 = vmatpush1.bf16.msra.mxu0 0
    %345 = vmatprep.mubr.bf16.mxu0 0
    %346 = vmatmul.mubr.bf16.gmra.mrb[0].mxu0 %v311
    %v347 = vpop.f32.mrb[0].mxu0
    %v348 = vadd.f32 0.0, %v347
    %v349 = vpop.f32.mrb[0].mxu0
    %v350 = vpop.f32.mrb[0].mxu0
    %v351 = vadd.f32 0.0, %v350
    %v352 = vpop.f32.mrb[0].mxu0
    %353 = vdwg.mxu0
    %v354 = vadd.f32 %v281, %v348
    %v355 = vadd.f32 %v282, %v351
    %356 = vst [vmem:[#allocation7] sm:$0xff] %v354
    %357 = vst [vmem:[#allocation7 + $0x8] sm:$0xff] %v355
    // Predicated region
    $region18: #{_forward_impl.1} parent=1 // pred_check
      _
    $region19: #{_forward_impl.1} parent=1 // pred_check_branch
      %359 = sbr.rel (0) target = $region21
    $region20: #{_forward_impl.1} parent=1 // pred_region
      %s361 = ssub.s32 256, 256
      %362 = vsyncadd [#allocation4], %s361
      %s363 = sshll.u32 [#allocation7], 4
      %s364 = int_to_ptr.vmem [resolvable:$true] %s363
      %369 = dma.vmem_to_hbm [thread:$0]  %s364, 256, %s2, [#allocation4], 128, 128, 8
    $region21: #{_forward_impl.1} parent=1 // pred_fallthru
      _
    // Predicated region
    $region22: #{_forward_impl.1} parent=1 // pred_check
      _
    $region23: #{_forward_impl.1} parent=1 // pred_check_branch
      %371 = sbr.rel (0) target = $region25
    $region24: #{_forward_impl.1} parent=1 // pred_region
      %372 = dma.done [#allocation4], 256
    $region25: #{_forward_impl.1} parent=1 // pred_fallthru
      _
    %373 = vsyncpa [#allocation3], 1
    %374 = vsyncpa [#allocation6], 1
    %375 = vsyncpa [#allocation4], 1

// kernel: _forward_impl.1
$region0: #{_forward_impl.1}
  #allocation0 [shape = 'u32[]', space=smem, size = 0x4, offset = 0x4, fixed_abs, tag = 'smem constant byte address 0x4 - core index']
  #allocation1 [shape = 'u32[144,128]{1,0:T(1,128)}', space=vmem, size = 0x12000, scoped, tag = 'internal scratch']
  %s0 = inlined_call_operand.hbm [shape: bf16[16,8], index: 0, kind: input, shape index: {}]
  %s1 = inlined_call_operand.hbm [shape: bf16[136,160], index: 1, kind: input, shape index: {}]
  %s2 = inlined_call_operand.hbm [shape: f32[16,128], index: 2, kind: output, shape index: {}]
  %s3 = sld [smem:[#allocation0]]
  $region26: #{_forward_impl.1} parent=0
    _
  %s5 = ssub.s32 1, %s3
  %s6 = scalar_select 0, %s5, %s3
  $region1: #{_forward_impl.1} parent=0
    #allocation2 [shape = 'u8[4096]{0}', space=vmem, size = 0x1000, scoped, tag = 'input window, operand 0, single buffered']
    #allocation3 [shape = 's32[1]{0}', space=sflag, size = 0x4, scoped, tag = 'scoped memory for _forward_impl.1']
    #allocation4 [shape = 's32[1]{0}', space=sflag, size = 0x4, scoped, tag = 'scoped memory for _forward_impl.1']
    #allocation5 [shape = 'u8[69632]{0}', space=vmem, size = 0x11000, scoped, tag = 'input window, operand 1, single buffered']
    #allocation6 [shape = 's32[1]{0}', space=sflag, size = 0x4, scoped, tag = 'scoped memory for _forward_impl.1']
    #allocation7 [shape = 'u8[8192]{0}', space=vmem, size = 0x2000, scoped, tag = 'output window, operand 0, single buffered']
    %7 = vsyncpa [#allocation3], 0
    %8 = vsyncpa [#allocation6], 0
    %9 = vsyncpa [#allocation4], 0
    // Predicated region
    $region2: #{_forward_impl.1} parent=1 // pred_check
      _
    $region3: #{_forward_impl.1} parent=1 // pred_check_branch
      %11 = sbr.rel (0) target = $region5
    $region4: #{_forward_impl.1} parent=1 // pred_region
      %s13 = ssub.s32 128, 128
      %14 = vsyncadd [#allocation3], %s13
      %s15 = sshll.u32 [#allocation2], 4
      %s16 = int_to_ptr.vmem [resolvable:$true] %s15
      %21 = dma.hbm_to_vmem [thread:$0]  %s0, 128, %s16, [#allocation3], 64, 64, 4
    $region5: #{_forward_impl.1} parent=1 // pred_fallthru
      _
    // Predicated region
    $region6: #{_forward_impl.1} parent=1 // pred_check
      _
    $region7: #{_forward_impl.1} parent=1 // pred_check_branch
      %23 = sbr.rel (0) target = $region9
    $region8: #{_forward_impl.1} parent=1 // pred_region
      %s25 = ssub.s32 2176, 2176
      %26 = vsyncadd [#allocation6], %s25
      %s27 = sshll.u32 [#allocation5], 4
      %s28 = int_to_ptr.vmem [resolvable:$true] %s27
      %33 = dma.hbm_to_vmem [thread:$0]  %s1, 2176, %s28, [#allocation6], 128, 128, 8
    $region9: #{_forward_impl.1} parent=1 // pred_fallthru
      _
    // Predicated region
    $region10: #{_forward_impl.1} parent=1 // pred_check
      _
    $region11: #{_forward_impl.1} parent=1 // pred_check_branch
      %35 = sbr.rel (0) target = $region13
    $region12: #{_forward_impl.1} parent=1 // pred_region
      %36 = dma.done [#allocation3], 128
    $region13: #{_forward_impl.1} parent=1 // pred_fallthru
      _
    // Predicated region
    $region14: #{_forward_impl.1} parent=1 // pred_check
      _
    $region15: #{_forward_impl.1} parent=1 // pred_check_branch
      %38 = sbr.rel (0) target = $region17
    $region16: #{_forward_impl.1} parent=1 // pred_region
      %39 = dma.done [#allocation6], 2176
    $region17: #{_forward_impl.1} parent=1 // pred_fallthru
      _
    %v41 = vld [vmem:[#allocation2] sm:$0xf]
    %v42 = vld [vmem:[#allocation2 + $0x4] sm:$0xf]
    %v43 = vld [vmem:[#allocation5 + $0x80] sm:$0x1]
    %v44 = vunpack.c.l.bf16 %v43
    %v45 = vld [vmem:[#allocation5] sm:$0xff]
    %v48 = vunpack.c.l.b16 %v41
    %v49 = vunpack.c.l.b16 %v42
    %v50 = vpack.c.b16 %v49, %v48
    %v52 = vunpack.c.l.b16 %v45
    %v53 = vunpack.c.h.b16 %v45
    %v54 = vpack.c.b16 %v52, %v52
    %v55 = vpack.c.b16 %v53, %v53
    %vm56 = vcmask 64512
    %v58 = vsel %vm56, %v50, 0
    %vm60 = vcmask 1043456
    %v62 = vsel %vm60, %v54, 0
    %v65 = vsel %vm60, %v55, 0
    %67 = vmatprep.subr.bf16.mxu0 %v65
    %68 = vmatpush1.bf16.msra.mxu0 %v62
    %69 = vmatprep.subr.bf16.mxu0 0
    %70 = vmatpush1.bf16.msra.mxu0 0
    %71 = vmatprep.subr.bf16.mxu0 0
    %72 = vmatpush1.bf16.msra.mxu0 0
    %73 = vmatprep.subr.bf16.mxu0 0
    %74 = vmatpush1.bf16.msra.mxu0 0
    %75 = vmatprep.subr.bf16.mxu0 0
    %76 = vmatpush1.bf16.msra.mxu0 0
    %77 = vmatprep.subr.bf16.mxu0 0
    %78 = vmatpush1.bf16.msra.mxu0 0
    %79 = vmatprep.subr.bf16.mxu0 0
    %80 = vmatpush1.bf16.msra.mxu0 0
    %81 = vmatprep.subr.bf16.mxu0 0
    %82 = vmatpush1.bf16.msra.mxu0 0
    %83 = vmatprep.subr.bf16.mxu0 0
    %84 = vmatpush1.bf16.msra.mxu0 0
    %85 = vmatprep.subr.bf16.mxu0 0
    %86 = vmatpush1.bf16.msra.mxu0 0
    %87 = vmatprep.subr.bf16.mxu0 0
    %88 = vmatpush1.bf16.msra.mxu0 0
    %89 = vmatprep.subr.bf16.mxu0 0
    %90 = vmatpush1.bf16.msra.mxu0 0
    %91 = vmatprep.subr.bf16.mxu0 0
    %92 = vmatpush1.bf16.msra.mxu0 0
    %93 = vmatprep.subr.bf16.mxu0 0
    %94 = vmatpush1.bf16.msra.mxu0 0
    %95 = vmatprep.subr.bf16.mxu0 0
    %96 = vmatpush1.bf16.msra.mxu0 0
    %97 = vmatprep.subr.bf16.mxu0 0
    %98 = vmatpush1.bf16.msra.mxu0 0
    %99 = vmatprep.mubr.bf16.mxu0 0
    %100 = vmatmul.mubr.bf16.gmra.mrb[0].mxu0 %v58
    %v101 = vpop.f32.mrb[0].mxu0
    %v102 = vadd.f32 0.0, %v101
    %v103 = vpop.f32.mrb[0].mxu0
    %v104 = vadd.f32 0.0, %v103
    %v105 = vpop.f32.mrb[0].mxu0
    %v106 = vadd.f32 0.0, %v105
    %v107 = vpop.f32.mrb[0].mxu0
    %v108 = vadd.f32 0.0, %v107
    %109 = vdwg.mxu0
    %v110 = vlaneseq
    %v111 = vshrl.u32 %v110, 7
    %v112 = vsub.s32 0, %v111
    %v113 = vrot.slane %v44, %v112
    %v114 = vadd.f32 %v113, %v102
    %v115 = vadd.f32 %v113, %v106
    %v116 = vld [vmem:[#allocation5 + $0x8] sm:$0x1]
    %v117 = vunpack.c.l.bf16 %v116
    %v118 = vlaneseq
    %v119 = vshrl.u32 %v118, 7
    %v120 = vsub.s32 0, %v119
    %v121 = vrot.slane %v117, %v120
    %v122 = vadd.f32 %v104, %v121
    %v123 = vadd.f32 %v108, %v121
    %v124 = vmax.f32 %v122, 0.0
    %v125 = vmax.f32 %v123, 0.0
    %v126 = vpack.c.bf16 %v125, %v124
    %v127 = vld [vmem:[#allocation5 + $0x10] sm:$0xff]
    %v128 = vld [vmem:[#allocation5 + $0x18] sm:$0xff]
    %v129 = vld [vmem:[#allocation5 + $0x20] sm:$0xff]
    %v130 = vld [vmem:[#allocation5 + $0x28] sm:$0xff]
    %v135 = vunpack.c.l.b16 %v127
    %v136 = vunpack.c.h.b16 %v127
    %v137 = vunpack.c.l.b16 %v128
    %v138 = vunpack.c.h.b16 %v128
    %v139 = vunpack.c.l.b16 %v129
    %v140 = vunpack.c.h.b16 %v129
    %v141 = vunpack.c.l.b16 %v130
    %v142 = vunpack.c.h.b16 %v130
    %v143 = vpack.c.b16 %v137, %v135
    %v144 = vpack.c.b16 %v138, %v136
    %v145 = vpack.c.b16 %v141, %v139
    %v146 = vpack.c.b16 %v142, %v140
    %vm151 = vcmask 261120
    %v153 = vsel %vm151, %v126, 0
    %155 = vmatprep.subr.bf16.mxu0 %v144
    %156 = vmatpush1.bf16.msra.mxu0 %v143
    %157 = vmatprep.subr.bf16.mxu0 %v146
    %158 = vmatpush1.bf16.msra.mxu0 %v145
    %159 = vmatprep.subr.bf16.mxu0 0
    %160 = vmatpush1.bf16.msra.mxu0 0
    %161 = vmatprep.subr.bf16.mxu0 0
    %162 = vmatpush1.bf16.msra.mxu0 0
    %163 = vmatprep.subr.bf16.mxu0 0
    %164 = vmatpush1.bf16.msra.mxu0 0
    %165 = vmatprep.subr.bf16.mxu0 0
    %166 = vmatpush1.bf16.msra.mxu0 0
    %167 = vmatprep.subr.bf16.mxu0 0
    %168 = vmatpush1.bf16.msra.mxu0 0
    %169 = vmatprep.subr.bf16.mxu0 0
    %170 = vmatpush1.bf16.msra.mxu0 0
    %171 = vmatprep.subr.bf16.mxu0 0
    %172 = vmatpush1.bf16.msra.mxu0 0
    %173 = vmatprep.subr.bf16.mxu0 0
    %174 = vmatpush1.bf16.msra.mxu0 0
    %175 = vmatprep.subr.bf16.mxu0 0
    %176 = vmatpush1.bf16.msra.mxu0 0
    %177 = vmatprep.subr.bf16.mxu0 0
    %178 = vmatpush1.bf16.msra.mxu0 0
    %179 = vmatprep.subr.bf16.mxu0 0
    %180 = vmatpush1.bf16.msra.mxu0 0
    %181 = vmatprep.subr.bf16.mxu0 0
    %182 = vmatpush1.bf16.msra.mxu0 0
    %183 = vmatprep.subr.bf16.mxu0 0
    %184 = vmatpush1.bf16.msra.mxu0 0
    %185 = vmatprep.subr.bf16.mxu0 0
    %186 = vmatpush1.bf16.msra.mxu0 0
    %187 = vmatprep.mubr.bf16.mxu0 0
    %188 = vmatmul.mubr.bf16.gmra.mrb[0].mxu0 %v153
    %v189 = vpop.f32.mrb[0].mxu0
    %v190 = vadd.f32 0.0, %v189
    %v191 = vpop.f32.mrb[0].mxu0
    %v192 = vadd.f32 0.0, %v191
    %v193 = vpop.f32.mrb[0].mxu0
    %v194 = vadd.f32 0.0, %v193
    %v195 = vpop.f32.mrb[0].mxu0
    %v196 = vadd.f32 0.0, %v195
    %197 = vdwg.mxu0
    %v198 = vadd.f32 %v114, %v190
    %v199 = vadd.f32 %v115, %v194
    %v200 = vld [vmem:[#allocation5 + $0x30] sm:$0x1]
    %v201 = vunpack.c.l.bf16 %v200
    %v202 = vlaneseq
    %v203 = vshrl.u32 %v202, 7
    %v204 = vsub.s32 0, %v203
    %v205 = vrot.slane %v201, %v204
    %v206 = vadd.f32 %v192, %v205
    %v207 = vadd.f32 %v196, %v205
    %v208 = vmax.f32 %v206, 0.0
    %v209 = vmax.f32 %v207, 0.0
    %v210 = vpack.c.bf16 %v209, %v208
    %v211 = vld [vmem:[#allocation5 + $0x38] sm:$0xff]
    %v212 = vld [vmem:[#allocation5 + $0x40] sm:$0xff]
    %v213 = vld [vmem:[#allocation5 + $0x48] sm:$0xff]
    %v214 = vld [vmem:[#allocation5 + $0x50] sm:$0xff]
    %v219 = vunpack.c.l.b16 %v211
    %v220 = vunpack.c.h.b16 %v211
    %v221 = vunpack.c.l.b16 %v212
    %v222 = vunpack.c.h.b16 %v212
    %v223 = vunpack.c.l.b16 %v213
    %v224 = vunpack.c.h.b16 %v213
    %v225 = vunpack.c.l.b16 %v214
    %v226 = vunpack.c.h.b16 %v214
    %v227 = vpack.c.b16 %v221, %v219
    %v228 = vpack.c.b16 %v222, %v220
    %v229 = vpack.c.b16 %v225, %v223
    %v230 = vpack.c.b16 %v226, %v224
    %v236 = vsel %vm151, %v210, 0
    %238 = vmatprep.subr.bf16.mxu0 %v228
    %239 = vmatpush1.bf16.msra.mxu0 %v227
    %240 = vmatprep.subr.bf16.mxu0 %v230
    %241 = vmatpush1.bf16.msra.mxu0 %v229
    %242 = vmatprep.subr.bf16.mxu0 0
    %243 = vmatpush1.bf16.msra.mxu0 0
    %244 = vmatprep.subr.bf16.mxu0 0
    %245 = vmatpush1.bf16.msra.mxu0 0
    %246 = vmatprep.subr.bf16.mxu0 0
    %247 = vmatpush1.bf16.msra.mxu0 0
    %248 = vmatprep.subr.bf16.mxu0 0
    %249 = vmatpush1.bf16.msra.mxu0 0
    %250 = vmatprep.subr.bf16.mxu0 0
    %251 = vmatpush1.bf16.msra.mxu0 0
    %252 = vmatprep.subr.bf16.mxu0 0
    %253 = vmatpush1.bf16.msra.mxu0 0
    %254 = vmatprep.subr.bf16.mxu0 0
    %255 = vmatpush1.bf16.msra.mxu0 0
    %256 = vmatprep.subr.bf16.mxu0 0
    %257 = vmatpush1.bf16.msra.mxu0 0
    %258 = vmatprep.subr.bf16.mxu0 0
    %259 = vmatpush1.bf16.msra.mxu0 0
    %260 = vmatprep.subr.bf16.mxu0 0
    %261 = vmatpush1.bf16.msra.mxu0 0
    %262 = vmatprep.subr.bf16.mxu0 0
    %263 = vmatpush1.bf16.msra.mxu0 0
    %264 = vmatprep.subr.bf16.mxu0 0
    %265 = vmatpush1.bf16.msra.mxu0 0
    %266 = vmatprep.subr.bf16.mxu0 0
    %267 = vmatpush1.bf16.msra.mxu0 0
    %268 = vmatprep.subr.bf16.mxu0 0
    %269 = vmatpush1.bf16.msra.mxu0 0
    %270 = vmatprep.mubr.bf16.mxu0 0
    %271 = vmatmul.mubr.bf16.gmra.mrb[0].mxu0 %v236
    %v272 = vpop.f32.mrb[0].mxu0
    %v273 = vadd.f32 0.0, %v272
    %v274 = vpop.f32.mrb[0].mxu0
    %v275 = vadd.f32 0.0, %v274
    %v276 = vpop.f32.mrb[0].mxu0
    %v277 = vadd.f32 0.0, %v276
    %v278 = vpop.f32.mrb[0].mxu0
    %v279 = vadd.f32 0.0, %v278
    %280 = vdwg.mxu0
    %v281 = vadd.f32 %v198, %v273
    %v282 = vadd.f32 %v199, %v277
    %v283 = vld [vmem:[#allocation5 + $0x58] sm:$0x1]
    %v284 = vunpack.c.l.bf16 %v283
    %v285 = vlaneseq
    %v286 = vshrl.u32 %v285, 7
    %v287 = vsub.s32 0, %v286
    %v288 = vrot.slane %v284, %v287
    %v289 = vadd.f32 %v275, %v288
    %v290 = vadd.f32 %v279, %v288
    %v291 = vmax.f32 %v289, 0.0
    %v292 = vmax.f32 %v290, 0.0
    %v293 = vpack.c.bf16 %v292, %v291
    %v294 = vld [vmem:[#allocation5 + $0x60] sm:$0xf]
    %v295 = vld [vmem:[#allocation5 + $0x68] sm:$0xf]
    %v296 = vld [vmem:[#allocation5 + $0x70] sm:$0xf]
    %v297 = vld [vmem:[#allocation5 + $0x78] sm:$0xf]
    %v302 = vunpack.c.l.b16 %v294
    %v303 = vunpack.c.l.b16 %v295
    %v304 = vunpack.c.l.b16 %v296
    %v305 = vunpack.c.l.b16 %v297
    %v306 = vpack.c.b16 %v303, %v302
    %v307 = vpack.c.b16 %v305, %v304
    %v311 = vsel %vm151, %v293, 0
    %313 = vmatprep.subr.bf16.mxu0 0
    %314 = vmatpush1.bf16.msra.mxu0 %v306
    %315 = vmatprep.subr.bf16.mxu0 0
    %316 = vmatpush1.bf16.msra.mxu0 %v307
    %317 = vmatprep.subr.bf16.mxu0 0
    %318 = vmatpush1.bf16.msra.mxu0 0
    %319 = vmatprep.subr.bf16.mxu0 0
    %320 = vmatpush1.bf16.msra.mxu0 0
    %321 = vmatprep.subr.bf16.mxu0 0
    %322 = vmatpush1.bf16.msra.mxu0 0
    %323 = vmatprep.subr.bf16.mxu0 0
    %324 = vmatpush1.bf16.msra.mxu0 0
    %325 = vmatprep.subr.bf16.mxu0 0
    %326 = vmatpush1.bf16.msra.mxu0 0
    %327 = vmatprep.subr.bf16.mxu0 0
    %328 = vmatpush1.bf16.msra.mxu0 0
    %329 = vmatprep.subr.bf16.mxu0 0
    %330 = vmatpush1.bf16.msra.mxu0 0
    %331 = vmatprep.subr.bf16.mxu0 0
    %332 = vmatpush1.bf16.msra.mxu0 0
    %333 = vmatprep.subr.bf16.mxu0 0
    %334 = vmatpush1.bf16.msra.mxu0 0
    %335 = vmatprep.subr.bf16.mxu0 0
    %336 = vmatpush1.bf16.msra.mxu0 0
    %337 = vmatprep.subr.bf16.mxu0 0
    %338 = vmatpush1.bf16.msra.mxu0 0
    %339 = vmatprep.subr.bf16.mxu0 0
    %340 = vmatpush1.bf16.msra.mxu0 0
    %341 = vmatprep.subr.bf16.mxu0 0
    %342 = vmatpush1.bf16.msra.mxu0 0
    %343 = vmatprep.subr.bf16.mxu0 0
    %344 = vmatpush1.bf16.msra.mxu0 0
    %345 = vmatprep.mubr.bf16.mxu0 0
    %346 = vmatmul.mubr.bf16.gmra.mrb[0].mxu0 %v311
    %v347 = vpop.f32.mrb[0].mxu0
    %v348 = vadd.f32 0.0, %v347
    %v349 = vpop.f32.mrb[0].mxu0
    %v350 = vpop.f32.mrb[0].mxu0
    %v351 = vadd.f32 0.0, %v350
    %v352 = vpop.f32.mrb[0].mxu0
    %353 = vdwg.mxu0
    %v354 = vadd.f32 %v281, %v348
    %v355 = vadd.f32 %v282, %v351
    %356 = vst [vmem:[#allocation7] sm:$0xff] %v354
    %357 = vst [vmem:[#allocation7 + $0x8] sm:$0xff] %v355
    // Predicated region
    $region18: #{_forward_impl.1} parent=1 // pred_check
      _
    $region19: #{_forward_impl.1} parent=1 // pred_check_branch
      %359 = sbr.rel (0) target = $region21
    $region20: #{_forward_impl.1} parent=1 // pred_region
      %s361 = ssub.s32 256, 256
      %362 = vsyncadd [#allocation4], %s361
      %s363 = sshll.u32 [#allocation7], 4
      %s364 = int_to_ptr.vmem [resolvable:$true] %s363
      %369 = dma.vmem_to_hbm [thread:$0]  %s364, 256, %s2, [#allocation4], 128, 128, 8
    $region21: #{_forward_impl.1} parent=1 // pred_fallthru
      _
    // Predicated region
    $region22: #{_forward_impl.1} parent=1 // pred_check
      _
    $region23: #{_forward_impl.1} parent=1 // pred_check_branch
      %371 = sbr.rel (0) target = $region25
    $region24: #{_forward_impl.1} parent=1 // pred_region
      %372 = dma.done [#allocation4], 256
    $region25: #{_forward_impl.1} parent=1 // pred_fallthru
      _
    %373 = vsyncpa [#allocation3], 1
    %374 = vsyncpa [#allocation6], 1
    %375 = vsyncpa [#allocation4], 1

</llo_original>
